<compile_context>
chip_gen: v7x
topology: tpu7x:2x2x1
jax: 0.10.0
libtpu: 0.0.40
codegen_flags: <defaults>
</compile_context>

<pallas_src>
import functools

import jax
import jax.numpy as jnp
from jax.experimental import pallas as pl
from jax.experimental.pallas import tpu as pltpu  # noqa: F401  (TPU backend assumed)


def _nopad_mse_kernel(out_ref, tgt_ref, len_ref, dof_ref, scalar_ref, *, reduction):
    B, T, D = out_ref.shape
    lens = len_ref[...]                                        # (B, 1) int32
    lens3 = lens.reshape(B, 1, 1)

    # time mask: mask[b, t, d] = (t < seq_length[b])
    t_idx = jax.lax.broadcasted_iota(jnp.int32, (B, T, D), 1)
    mask = t_idx < lens3                                       # (B, T, D) bool

    diff = out_ref[...] - tgt_ref[...]                         # (B, T, D) f32
    sq = jnp.where(mask, diff * diff, 0.0)

    per_item = jnp.sum(sq, axis=1)                             # (B, D): sum over valid time
    if reduction == 'mean':
        per_item = per_item / lens.astype(jnp.float32)         # mean over each sample's length
        loss_dof = jnp.mean(per_item, axis=0, keepdims=True)   # (1, D): mean over batch
        final = jnp.mean(loss_dof, axis=1, keepdims=True)      # (1, 1): mean over dof
    else:  # 'sum'
        loss_dof = jnp.sum(per_item, axis=0, keepdims=True)    # (1, D)
        final = jnp.sum(loss_dof, axis=1, keepdims=True)       # (1, 1)

    dof_ref[...] = loss_dof
    scalar_ref[...] = final


@functools.partial(jax.jit, static_argnames=('reduction', 'keep_dof'))
def nopad_mse_loss(output, target, seq_length, reduction='mean', keep_dof=False):
    if reduction not in ('mean', 'sum'):
        raise ValueError('reduction type can only be "mean" or "sum"')
    assert output.shape == target.shape and output.shape[0] == seq_length.shape[0]
    B, T, D = output.shape
    lens = seq_length.astype(jnp.int32).reshape(B, 1)

    kernel = functools.partial(_nopad_mse_kernel, reduction=reduction)
    dof_loss, scalar_loss = pl.pallas_call(
        kernel,
        grid=(1,),
        in_specs=[
            pl.BlockSpec((B, T, D), lambda i: (0, 0, 0)),
            pl.BlockSpec((B, T, D), lambda i: (0, 0, 0)),
            pl.BlockSpec((B, 1), lambda i: (0, 0)),
        ],
        out_specs=(
            pl.BlockSpec((1, D), lambda i: (0, 0)),
            pl.BlockSpec((1, 1), lambda i: (0, 0)),
        ),
        out_shape=(
            jax.ShapeDtypeStruct((1, D), jnp.float32),
            jax.ShapeDtypeStruct((1, 1), jnp.float32),
        ),
    )(output.astype(jnp.float32), target.astype(jnp.float32), lens)

    return dof_loss[0] if keep_dof else scalar_loss[0, 0]


def _reference(out, tgt, lens, reduction='mean', keep_dof=False):
    """Direct JAX transcription of the PyTorch forward (per-sample loop)."""
    calc = jnp.mean if reduction == 'mean' else jnp.sum
    errs = []
    for i in range(out.shape[0]):
        L = int(lens[i])
        e = out[i, :L] - tgt[i, :L]
        errs.append(calc(e * e, axis=0))
    loss = calc(jnp.stack(errs), axis=0)
    return loss if keep_dof else calc(loss)


if __name__ == "__main__":
    key = jax.random.PRNGKey(0)
    k1, k2 = jax.random.split(key)
    B, T, D = 2, 8, 4                              # batch=2, seq=8, dof=4 (as the module implies)
    output = jax.random.normal(k1, (B, T, D), jnp.float32)
    target = jax.random.normal(k2, (B, T, D), jnp.float32)
    seq_length = jnp.array([5, 8], dtype=jnp.int32)

    ok = True
    for reduction in ('mean', 'sum'):
        for keep_dof in (False, True):
            got = jax.block_until_ready(
                nopad_mse_loss(output, target, seq_length,
                               reduction=reduction, keep_dof=keep_dof))
            ref = _reference(output, target, seq_length, reduction, keep_dof)
            ok = ok and bool(jnp.allclose(got, ref, rtol=1e-5, atol=1e-5))
            ok = ok and bool(jnp.all(jnp.isfinite(got)))

    assert ok, "Pallas nopad_mse_loss does not match the reference"
    print("KERNEL_OK")
</pallas_src>

<mosaic_0001>
module attributes {stable_mosaic.version = 11 : i64} {
  func.func @_nopad_mse_kernel(%arg0: i32, %arg1: memref<2x8x4xf32, #tpu.memory_space<vmem>>, %arg2: memref<2x8x4xf32, #tpu.memory_space<vmem>>, %arg3: memref<2x1xi32, #tpu.memory_space<vmem>>, %arg4: memref<1x4xf32, #tpu.memory_space<vmem>>, %arg5: memref<1x1xf32, #tpu.memory_space<vmem>>) attributes {dimension_semantics = [#tpu.dimension_semantics<arbitrary>], iteration_bounds = array<i64: 1>, scalar_prefetch = 0 : i64, scratch_operands = 0 : i64, tpu.core_type = #tpu.core_type<tc>, window_params = [{pipeline_mode = #tpu.pipeline_mode<synchronous>, transform_indices = @transform_0, window_bounds = array<i64: 2, 8, 4>}, {pipeline_mode = #tpu.pipeline_mode<synchronous>, transform_indices = @transform_1, window_bounds = array<i64: 2, 8, 4>}, {pipeline_mode = #tpu.pipeline_mode<synchronous>, transform_indices = @transform_2, window_bounds = array<i64: 2, 1>}, {pipeline_mode = #tpu.pipeline_mode<synchronous>, transform_indices = @transform_3, window_bounds = array<i64: 1, 4>}, {pipeline_mode = #tpu.pipeline_mode<synchronous>, transform_indices = @transform_4, window_bounds = array<i64: 1, 1>}]} {
    %c0 = arith.constant 0 : index
    %c0_0 = arith.constant 0 : index
    %0 = vector.load %arg3[%c0, %c0_0] : memref<2x1xi32, #tpu.memory_space<vmem>>, vector<2x1xi32>
    %1 = vector.shape_cast %0 : vector<2x1xi32> to vector<2x1x1xi32>
    %2 = tpu.iota {dimensions = array<i32: 1>} : vector<2x8x4xi32>
    %3 = vector.broadcast %1 : vector<2x1x1xi32> to vector<2x8x4xi32>
    %4 = arith.cmpi slt, %2, %3 : vector<2x8x4xi32>
    %c0_1 = arith.constant 0 : index
    %c0_2 = arith.constant 0 : index
    %c0_3 = arith.constant 0 : index
    %5 = vector.load %arg1[%c0_1, %c0_2, %c0_3] : memref<2x8x4xf32, #tpu.memory_space<vmem>>, vector<2x8x4xf32>
    %c0_4 = arith.constant 0 : index
    %c0_5 = arith.constant 0 : index
    %c0_6 = arith.constant 0 : index
    %6 = vector.load %arg2[%c0_4, %c0_5, %c0_6] : memref<2x8x4xf32, #tpu.memory_space<vmem>>, vector<2x8x4xf32>
    %7 = arith.subf %5, %6 : vector<2x8x4xf32>
    %8 = arith.mulf %7, %7 : vector<2x8x4xf32>
    %cst = arith.constant 0.000000e+00 : f32
    %9 = vector.broadcast %cst : f32 to vector<2x8x4xf32>
    %10 = arith.select %4, %8, %9 : vector<2x8x4xi1>, vector<2x8x4xf32>
    %cst_7 = arith.constant dense<0.000000e+00> : vector<2x4xf32>
    %11 = vector.multi_reduction <add>, %10, %cst_7 [1] : vector<2x8x4xf32> to vector<2x4xf32>
    %12 = arith.sitofp %0 : vector<2x1xi32> to vector<2x1xf32>
    %13 = vector.broadcast %12 : vector<2x1xf32> to vector<2x4xf32>
    %14 = arith.divf %11, %13 : vector<2x4xf32>
    %cst_8 = arith.constant dense<0.000000e+00> : vector<4xf32>
    %15 = vector.multi_reduction <add>, %14, %cst_8 [0] : vector<2x4xf32> to vector<4xf32>
    %16 = vector.shape_cast %15 : vector<4xf32> to vector<1x4xf32>
    %cst_9 = arith.constant 2.000000e+00 : f32
    %17 = vector.broadcast %cst_9 : f32 to vector<1x4xf32>
    %18 = arith.divf %16, %17 : vector<1x4xf32>
    %cst_10 = arith.constant dense<0.000000e+00> : vector<1xf32>
    %19 = vector.multi_reduction <add>, %18, %cst_10 [1] : vector<1x4xf32> to vector<1xf32>
    %20 = vector.shape_cast %19 : vector<1xf32> to vector<1x1xf32>
    %cst_11 = arith.constant 4.000000e+00 : f32
    %21 = vector.broadcast %cst_11 : f32 to vector<1x1xf32>
    %22 = arith.divf %20, %21 : vector<1x1xf32>
    %c0_12 = arith.constant 0 : index
    %c0_13 = arith.constant 0 : index
    %23 = vector.load %arg4[%c0_12, %c0_13] : memref<1x4xf32, #tpu.memory_space<vmem>>, vector<1x4xf32>
    tpu.vector_store %arg4[%c0_12, %c0_13], %18 {strides = array<i32>} : memref<1x4xf32, #tpu.memory_space<vmem>>, vector<1x4xf32>,
    %c0_14 = arith.constant 0 : index
    %c0_15 = arith.constant 0 : index
    %24 = vector.load %arg5[%c0_14, %c0_15] : memref<1x1xf32, #tpu.memory_space<vmem>>, vector<1x1xf32>
    tpu.vector_store %arg5[%c0_14, %c0_15], %22 {strides = array<i32>} : memref<1x1xf32, #tpu.memory_space<vmem>>, vector<1x1xf32>,
    return
  }
  func.func @transform_0(%arg0: i32) -> (i32, i32, i32) {
    %c0_i32 = arith.constant 0 : i32
    %c0_i32_0 = arith.constant 0 : i32
    %c0_i32_1 = arith.constant 0 : i32
    %c0_i32_2 = arith.constant 0 : i32
    return %c0_i32, %c0_i32_0, %c0_i32_1 : i32, i32, i32
  }
  func.func @transform_1(%arg0: i32) -> (i32, i32, i32) {
    %c0_i32 = arith.constant 0 : i32
    %c0_i32_0 = arith.constant 0 : i32
    %c0_i32_1 = arith.constant 0 : i32
    %c0_i32_2 = arith.constant 0 : i32
    return %c0_i32, %c0_i32_0, %c0_i32_1 : i32, i32, i32
  }
  func.func @transform_2(%arg0: i32) -> (i32, i32) {
    %c0_i32 = arith.constant 0 : i32
    %c0_i32_0 = arith.constant 0 : i32
    %c0_i32_1 = arith.constant 0 : i32
    return %c0_i32, %c0_i32_0 : i32, i32
  }
  func.func @transform_3(%arg0: i32) -> (i32, i32) {
    %c0_i32 = arith.constant 0 : i32
    %c0_i32_0 = arith.constant 0 : i32
    %c0_i32_1 = arith.constant 0 : i32
    return %c0_i32, %c0_i32_0 : i32, i32
  }
  func.func @transform_4(%arg0: i32) -> (i32, i32) {
    %c0_i32 = arith.constant 0 : i32
    %c0_i32_0 = arith.constant 0 : i32
    %c0_i32_1 = arith.constant 0 : i32
    return %c0_i32, %c0_i32_0 : i32, i32
  }
}

</mosaic_0001>

<llo_original>
// kernel: nopad_mse_loss.1
$region0: #{nopad_mse_loss.1}
  #allocation0 [shape = 'u32[]', space=smem, size = 0x4, offset = 0x4, fixed_abs, tag = 'smem constant byte address 0x4 - core index']
  #allocation1 [shape = 'u32[144,128]{1,0:T(1,128)}', space=vmem, size = 0x12000, scoped, tag = 'internal scratch']
  %s0 = inlined_call_operand.vmem [shape: f32[2,8,4], index: 0, kind: input, shape index: {}]
  %s1 = inlined_call_operand.vmem [shape: f32[2,8,4], index: 1, kind: input, shape index: {}]
  %s2 = inlined_call_operand.vmem [shape: s32[2,1], index: 2, kind: input, shape index: {}]
  %s3 = inlined_call_operand.hbm [shape: f32[1,4], index: 3, kind: output, shape index: {0}]
  %s4 = inlined_call_operand.hbm [shape: f32[1,1], index: 4, kind: output, shape index: {1}]
  %5 = xla_tuple %s3, %s4
  %s6 = sld [smem:[#allocation0]]
  $region30: #{nopad_mse_loss.1} parent=0
    _
  %s8 = ssub.s32 1, %s6
  %s9 = scalar_select 0, %s8, %s6
  $region1: #{nopad_mse_loss.1} parent=0
    #allocation2 [shape = 'u8[512]{0}', space=vmem, size = 0x400, scoped, tag = 'output window, operand 0, single buffered']
    #allocation3 [shape = 's32[1]{0}', space=sflag, size = 0x4, scoped, tag = 'scoped memory for nopad_mse_loss.1']
    #allocation4 [shape = 'u8[512]{0}', space=vmem, size = 0x400, scoped, tag = 'output window, operand 1, single buffered']
    #allocation5 [shape = 's32[1]{0}', space=sflag, size = 0x4, scoped, tag = 'scoped memory for nopad_mse_loss.1']
    %10 = vsyncpa [#allocation3], 0
    %11 = vsyncpa [#allocation5], 0
    // Predicated region
    $region2: #{nopad_mse_loss.1} parent=1 // pred_check
      _
    $region3: #{nopad_mse_loss.1} parent=1 // pred_check_branch
      %13 = sbr.rel (0) target = $region5
    $region4: #{nopad_mse_loss.1} parent=1 // pred_region
      _
    $region5: #{nopad_mse_loss.1} parent=1 // pred_fallthru
      _
    // Predicated region
    $region6: #{nopad_mse_loss.1} parent=1 // pred_check
      _
    $region7: #{nopad_mse_loss.1} parent=1 // pred_check_branch
      %15 = sbr.rel (0) target = $region9
    $region8: #{nopad_mse_loss.1} parent=1 // pred_region
      _
    $region9: #{nopad_mse_loss.1} parent=1 // pred_fallthru
      _
    // Predicated region
    $region10: #{nopad_mse_loss.1} parent=1 // pred_check
      _
    $region11: #{nopad_mse_loss.1} parent=1 // pred_check_branch
      %17 = sbr.rel (0) target = $region13
    $region12: #{nopad_mse_loss.1} parent=1 // pred_region
      _
    $region13: #{nopad_mse_loss.1} parent=1 // pred_fallthru
      _
    %v18 = vld [vmem:[%s2] sm:$0x3]
    %v20 = vunpack.c.l.s4 1966171168
    %v21 = vunpack.c.0.s8 %v20
    %v22 = vlaneseq
    %v23 = vshrl.u32 %v22, 7
    %v24 = vsub.s32 %v21, %v23
    %v25 = vrot.slane %v18, %v24
    %v26 = vcombine.high %v25, %v25
    %v28 = vunpack.c.l.s4 1966171168
    %v29 = vunpack.c.0.s8 %v28
    %v30 = vlaneseq
    %v31 = vshrl.u32 %v30, 7
    %v32 = vsub.s32 %v29, %v31
    %v33 = vrot.slane %v25, %v32
    %v35 = vunpack.c.l.s4 1966171168
    %v36 = vunpack.c.0.s8 %v35
    %v37 = vlaneseq
    %v38 = vshrl.u32 %v37, 7
    %v39 = vsub.s32 %v36, %v38
    %v40 = vrot.slane %v26, %v39
    %v41 = vlaneseq
    %v42 = vshrl.u32 %v41, 7
    %v43 = vlaneseq
    %v44 = vshrl.u32 %v43, 7
    %v45 = vsub.s32 0, %v44
    %v46 = vrot.slane %v33, %v45
    %v47 = vlaneseq
    %v48 = vshrl.u32 %v47, 7
    %v49 = vsub.s32 0, %v48
    %v50 = vrot.slane %v40, %v49
    %51 = vset.pattern.permute.xlu0 0
    %52 = vperm.xlu0 %51, %v46
    %v53 = vpop.permute.xlu0 %52
    %54 = vset.pattern.permute.xlu0 0
    %55 = vperm.xlu0 %54, %v50
    %v56 = vpop.permute.xlu0 %55
    %vm57 = vcmp.lt.s32.totalorder %v42, %v53
    %vm58 = vcmp.lt.s32.totalorder %v42, %v56
    %v59 = vld [vmem:[%s0] sm:$0xff]
    %v60 = vld [vmem:[%s0 + $0x8] sm:$0xff]
    %v61 = vld [vmem:[%s1] sm:$0xff]
    %v62 = vld [vmem:[%s1 + $0x8] sm:$0xff]
    %v63 = vsub.f32 %v59, %v61
    %v64 = vsub.f32 %v60, %v62
    %v65 = vmul.f32 %v63, %v63
    %v66 = vmul.f32 %v64, %v64
    %v67 = vsel %vm57, %v65, 0.0
    %v68 = vsel %vm58, %v66, 0.0
    %vm69 = vcmask 31744
    %v70 = vsel %vm69, %v67, 0.0
    %v71 = vrot.slane %v70, 4
    %v72 = vadd.f32 %v70, %v71
    %v73 = vrot.slane %v72, 2
    %v74 = vadd.f32 %v72, %v73
    %v75 = vrot.slane %v74, 1
    %v76 = vadd.f32 %v74, %v75
    %v77 = vsel %vm69, %v68, 0.0
    %v78 = vrot.slane %v77, 4
    %v79 = vadd.f32 %v77, %v78
    %v80 = vrot.slane %v79, 2
    %v81 = vadd.f32 %v79, %v80
    %v82 = vrot.slane %v81, 1
    %v83 = vadd.f32 %v81, %v82
    %v84 = vcvt.s32.f32 %v18
    %86 = vset.pattern.permute.xlu0 0
    %87 = vperm.xlu0 %86, %v84
    %v88 = vpop.permute.xlu0 %87
    %v89 = vrot.slane %v88, 1
    %v92 = vrcp.pop %v88
    %v93 = vmul.f32 %v76, %v92
    %v94 = vrcp.pop %v89
    %v95 = vmul.f32 %v83, %v94
    %v98 = vrot.slane %v95, 7
    %vm99 = vcmask 1041409
    %v100 = vsel %vm99, %v98, %v93
    %vm102 = vcmask 25600
    %v103 = vsel %vm102, %v100, 0.0
    %v104 = vrot.slane %v103, 4
    %v105 = vadd.f32 %v103, %v104
    %v106 = vrot.slane %v105, 2
    %v107 = vadd.f32 %v105, %v106
    %v108 = vrot.slane %v107, 1
    %v109 = vadd.f32 %v107, %v108
    %v110 = vrcp.pop 2.0
    %v111 = vmul.f32 %v109, %v110
    %vm112 = vcmask 24576
    %v113 = vsel %vm112, %v111, 0.0
    %114 = vadd.xlane.f32.xlu0 %v113
    %v115 = vpop.xlane.xlu0 %114
    %v116 = vrcp.pop 4.0
    %v117 = vmul.f32 %v115, %v116
    %118 = vst.msk [vmem:[#allocation2] sm:$0x1] %vm112, %v111
    %vm119 = vcmask 0
    %120 = vst.msk [vmem:[#allocation4] sm:$0x1] %vm119, %v117
    // Predicated region
    $region14: #{nopad_mse_loss.1} parent=1 // pred_check
      _
    $region15: #{nopad_mse_loss.1} parent=1 // pred_check_branch
      %122 = sbr.rel (0) target = $region17
    $region16: #{nopad_mse_loss.1} parent=1 // pred_region
      %s124 = ssub.s32 16, 16
      %125 = vsyncadd [#allocation3], %s124
      %s127 = sshll.u32 [#allocation2], 4
      %s128 = int_to_ptr.vmem [resolvable:$true] %s127
      %130 = dma.vmem_to_hbm [thread:$0]  %s128, 16, %s3, [#allocation3]
    $region17: #{nopad_mse_loss.1} parent=1 // pred_fallthru
      _
    // Predicated region
    $region18: #{nopad_mse_loss.1} parent=1 // pred_check
      _
    $region19: #{nopad_mse_loss.1} parent=1 // pred_check_branch
      %132 = sbr.rel (0) target = $region21
    $region20: #{nopad_mse_loss.1} parent=1 // pred_region
      %s134 = ssub.s32 16, 16
      %135 = vsyncadd [#allocation5], %s134
      %s137 = sshll.u32 [#allocation4], 4
      %s138 = int_to_ptr.vmem [resolvable:$true] %s137
      %140 = dma.vmem_to_hbm [thread:$0]  %s138, 16, %s4, [#allocation5]
    $region21: #{nopad_mse_loss.1} parent=1 // pred_fallthru
      _
    // Predicated region
    $region22: #{nopad_mse_loss.1} parent=1 // pred_check
      _
    $region23: #{nopad_mse_loss.1} parent=1 // pred_check_branch
      %142 = sbr.rel (0) target = $region25
    $region24: #{nopad_mse_loss.1} parent=1 // pred_region
      %143 = dma.done [#allocation3], 16
    $region25: #{nopad_mse_loss.1} parent=1 // pred_fallthru
      _
    // Predicated region
    $region26: #{nopad_mse_loss.1} parent=1 // pred_check
      _
    $region27: #{nopad_mse_loss.1} parent=1 // pred_check_branch
      %145 = sbr.rel (0) target = $region29
    $region28: #{nopad_mse_loss.1} parent=1 // pred_region
      %146 = dma.done [#allocation5], 16
    $region29: #{nopad_mse_loss.1} parent=1 // pred_fallthru
      _
    %147 = vsyncpa [#allocation3], 1
    %148 = vsyncpa [#allocation5], 1

</llo_original>
